<compile_context>
chip_gen: v7x
topology: tpu7x:2x2x1
jax: 0.10.0
libtpu: 0.0.40
codegen_flags: <defaults>
</compile_context>

<pallas_src>
import functools

import jax
import jax.numpy as jnp
from jax.experimental import pallas as pl
from jax.experimental.pallas import tpu as pltpu


def _round_up(x, m):
    return (x + m - 1) // m * m


def _num_tensorcores():
    """Best-effort TensorCore count per device; degrades to 1 if not exposed."""
    n = 1
    try:
        info = pltpu.get_tpu_info()
        for attr in ("num_cores", "num_tensorcores", "tensorcore_count", "core_count"):
            v = getattr(info, attr, None)
            if v is not None:
                try:
                    n = max(n, int(v))
                except Exception:
                    pass
    except Exception:
        pass
    try:
        v = getattr(jax.devices()[0], "num_cores", None)
        if v is not None:
            n = max(n, int(v))
    except Exception:
        pass
    return n


def _mlp_kernel(out_sizes, compute_dtype, x_ref, *refs):
    """refs = (w1, ..., wL, bias_pack, out_ref). ReLU after every layer but the last.

    Matmuls run in `compute_dtype` (bf16) on the MXU with f32 accumulation; the f32->bf16
    input cast, bias add, and ReLU epilogue stay in f32 on the VPU (v5e has no bf16 VALU).
    """
    out_ref = refs[-1]
    bias_ref = refs[-2]
    w_refs = refs[:-2]
    n_layers = len(w_refs)

    bias_all = bias_ref[...]                      # (n_layers, max_out_pad) f32
    h = x_ref[...]                                # (tile, input) f32
    for li in range(n_layers):
        w = w_refs[li][...]                       # (in, out) bf16
        o = out_sizes[li]
        b = bias_all[li:li + 1, :o]               # (1, o) f32 -> broadcasts over rows
        acc = jnp.dot(h.astype(compute_dtype), w.astype(compute_dtype),
                      preferred_element_type=jnp.float32) + b
        if li != n_layers - 1:
            h = jnp.maximum(acc, 0.0)             # f32 epilogue; recast at next dot
        else:
            h = acc
    out_ref[...] = h.astype(out_ref.dtype)


def prepare_bc_params(weights, biases, compute_dtype=jnp.bfloat16):
    """One-time parameter prep (call once, reuse every forward).

    weights: list of (in_i, out_i) f32   -> tuple of bf16 arrays (MXU inputs)
    biases:  list of (1, out_i) f32      -> single (n_layers, round_up(max_out, 128)) f32 pack
    """
    out_sizes = [int(w.shape[1]) for w in weights]
    max_out_pad = _round_up(max(out_sizes), 128)
    w_c = tuple(jnp.asarray(w).astype(compute_dtype) for w in weights)
    rows = []
    for b, o in zip(biases, out_sizes):
        b2 = jnp.asarray(b, jnp.float32).reshape(1, o)
        rows.append(jnp.pad(b2, ((0, 0), (0, max_out_pad - o))))
    bias_pack = jnp.concatenate(rows, axis=0)     # (n_layers, max_out_pad) f32
    return w_c, bias_pack


@functools.partial(jax.jit, static_argnames=("batch_tile", "compute_dtype"))
def bc_model_forward(state, weights, bias_pack, batch_tile=None,
                     compute_dtype=jnp.bfloat16):
    """Pallas forward pass for BehaviorCloningModel (state_based=True).

    state:     (B, input_size) float32
    weights:   tuple of (in_i, out_i) arrays in `compute_dtype` (from prepare_bc_params)
    bias_pack: (n_layers, max_out_pad) float32 (from prepare_bc_params)
    Returns:   (B, output_size) float32
    """
    B, input_size = state.shape
    out_sizes = tuple(int(w.shape[1]) for w in weights)
    output_size = out_sizes[-1]
    max_width = max((int(input_size),) + out_sizes)

    params = tuple(weights) + (bias_pack,)
    param_bytes = sum(int(p.size) * p.dtype.itemsize for p in params)

    # --- batch tiling: big tiles on single-TC chips; split across cores on multi-TC chips.
    if batch_tile is None:
        n_tc = _num_tensorcores()
        cap = 2048 if n_tc <= 1 else 1024
        batch_tile = min(cap, _round_up(int(B), 16))
        if n_tc > 1 and B >= 32 * n_tc:
            # Force grid_m >= n_tc so ("parallel",) shards the batch axis across TensorCores.
            batch_tile = min(batch_tile, _round_up(int(pl.cdiv(B, n_tc)), 16))
    batch_tile = max(16, _round_up(int(batch_tile), 16))

    def _footprint(bt):
        # double-buffered state/output tiles + double-buffered params + f32 activations
        return (2 * param_bytes
                + 2 * bt * (input_size + output_size) * 4
                + 2 * bt * max_width * 4)

    while batch_tile > 16 and _footprint(batch_tile) > 24 * 2**20:
        batch_tile = max(16, _round_up(batch_tile // 2, 16))

    grid_m = int(pl.cdiv(B, batch_tile))
    b_pad = grid_m * batch_tile

    state_p = state
    if b_pad != B:
        state_p = jnp.pad(state, ((0, b_pad - B), (0, 0)))  # zero rows are benign, sliced off

    est = _footprint(batch_tile)
    vmem_limit = int(min(48 * 2**20, max(2 * est, 4 * 2**20)))

    flops = 2 * b_pad * sum(int(w.shape[0]) * int(w.shape[1]) for w in weights)
    bytes_accessed = b_pad * input_size * 4 + param_bytes + b_pad * output_size * 4
    cost = pl.CostEstimate(flops=flops, transcendentals=0, bytes_accessed=bytes_accessed)

    kernel = functools.partial(_mlp_kernel, out_sizes, compute_dtype)

    in_specs = [pl.BlockSpec((batch_tile, input_size), lambda i: (i, 0))]
    for p in params:
        # grid-invariant blocks: fetched once, reused across all batch tiles
        in_specs.append(pl.BlockSpec(p.shape, lambda i: (0, 0)))
    out_spec = pl.BlockSpec((batch_tile, output_size), lambda i: (i, 0))

    out = pl.pallas_call(
        kernel,
        out_shape=jax.ShapeDtypeStruct((b_pad, output_size), jnp.float32),
        grid_spec=pltpu.PrefetchScalarGridSpec(
            num_scalar_prefetch=0,
            grid=(grid_m,),
            in_specs=in_specs,
            out_specs=out_spec,
        ),
        compiler_params=pltpu.CompilerParams(
            dimension_semantics=("parallel",),
            vmem_limit_bytes=vmem_limit,
        ),
        cost_estimate=cost,
    )(state_p, *params)

    return out[:B] if b_pad != B else out


def init_bc_params(key, input_size, output_size, hidden_layers):
    """Deterministic init mirroring torch.nn.Linear default (uniform +-1/sqrt(fan_in)),
    but stored as (in, out) so the kernel can do x @ W."""
    sizes = [input_size] + list(hidden_layers) + [output_size]
    weights, biases = [], []
    for i in range(len(sizes) - 1):
        fan_in, fan_out = sizes[i], sizes[i + 1]
        key, kw, kb = jax.random.split(key, 3)
        bound = 1.0 / jnp.sqrt(jnp.float32(fan_in))
        w = jax.random.uniform(kw, (fan_in, fan_out), jnp.float32, -bound, bound)
        b = jax.random.uniform(kb, (1, fan_out), jnp.float32, -bound, bound)
        weights.append(w)
        biases.append(b)
    return weights, biases


def bc_model_ref(state, weights, biases, compute_dtype=None):
    """Pure-JAX reference. If compute_dtype is given, mirrors the kernel's mixed precision
    (compute_dtype matmul inputs, f32 accumulation, f32 bias/ReLU)."""
    h = state
    for li, (w, b) in enumerate(zip(weights, biases)):
        if compute_dtype is not None:
            h = jnp.dot(h.astype(compute_dtype), w.astype(compute_dtype),
                        preferred_element_type=jnp.float32) + b
        else:
            h = h @ w + b
        if li != len(weights) - 1:
            h = jnp.maximum(h, 0.0)
    return h


if __name__ == "__main__":
    # Small shapes consistent with the module (state_based=True path):
    batch = 8
    input_size = 32
    hidden_layers = [64, 64]
    output_size = 16

    key = jax.random.PRNGKey(0)
    key, kstate = jax.random.split(key)
    state = jax.random.normal(kstate, (batch, input_size), jnp.float32)
    # pcs is unused when state_based=True (matches the PyTorch forward).
    # TODO(synk): state_based=False branch needs PointNetfeat, which is not defined in the module.

    weights, biases = init_bc_params(key, input_size, output_size, hidden_layers)
    # One-time prep (bf16 cast + bias packing) -- hoisted out of the per-call path.
    w_c, bias_pack = prepare_bc_params(weights, biases)

    out = bc_model_forward(state, w_c, bias_pack)
    out = jax.block_until_ready(out)
    assert out.shape == (batch, output_size)

    ref_mixed = bc_model_ref(state, weights, biases, compute_dtype=jnp.bfloat16)
    ref_f32 = bc_model_ref(state, weights, biases)
    assert jnp.allclose(out, ref_mixed, atol=1e-2, rtol=1e-2), "mismatch vs mixed-precision ref"
    assert jnp.allclose(out, ref_f32, atol=5e-2, rtol=5e-2), "mismatch vs f32 reference"

    # Ragged-batch / multi-step-grid path (B not a multiple of the tile), still small shapes.
    batch2 = 200
    key, k2 = jax.random.split(key)
    state2 = jax.random.normal(k2, (batch2, input_size), jnp.float32)
    out2 = jax.block_until_ready(bc_model_forward(state2, w_c, bias_pack, batch_tile=64))
    ref2 = bc_model_ref(state2, weights, biases, compute_dtype=jnp.bfloat16)
    assert out2.shape == (batch2, output_size)
    assert jnp.allclose(out2, ref2, atol=1e-2, rtol=1e-2), "mismatch (ragged batch)"

    print("KERNEL_OK")
</pallas_src>

<mosaic_0001>
module attributes {stable_mosaic.version = 11 : i64} {
  func.func @_mlp_kernel(%arg0: i32, %arg1: memref<16x32xf32, #tpu.memory_space<vmem>>, %arg2: memref<32x64xbf16, #tpu.memory_space<vmem>>, %arg3: memref<64x64xbf16, #tpu.memory_space<vmem>>, %arg4: memref<64x16xbf16, #tpu.memory_space<vmem>>, %arg5: memref<3x128xf32, #tpu.memory_space<vmem>>, %arg6: memref<16x16xf32, #tpu.memory_space<vmem>>) attributes {dimension_semantics = [#tpu.dimension_semantics<parallel>], iteration_bounds = array<i64: 1>, scalar_prefetch = 0 : i64, scratch_operands = 0 : i64, tpu.core_type = #tpu.core_type<tc>, window_params = [{transform_indices = @transform_0, window_bounds = array<i64: 16, 32>}, {pipeline_mode = #tpu.pipeline_mode<synchronous>, transform_indices = @transform_1, window_bounds = array<i64: 32, 64>}, {pipeline_mode = #tpu.pipeline_mode<synchronous>, transform_indices = @transform_2, window_bounds = array<i64: 64, 64>}, {pipeline_mode = #tpu.pipeline_mode<synchronous>, transform_indices = @transform_3, window_bounds = array<i64: 64, 16>}, {pipeline_mode = #tpu.pipeline_mode<synchronous>, transform_indices = @transform_4, window_bounds = array<i64: 3, 128>}, {transform_indices = @transform_5, window_bounds = array<i64: 16, 16>}]} {
    %c0 = arith.constant 0 : index
    %c0_0 = arith.constant 0 : index
    %0 = vector.load %arg5[%c0, %c0_0] : memref<3x128xf32, #tpu.memory_space<vmem>>, vector<3x128xf32>
    %c0_1 = arith.constant 0 : index
    %c0_2 = arith.constant 0 : index
    %1 = vector.load %arg1[%c0_1, %c0_2] : memref<16x32xf32, #tpu.memory_space<vmem>>, vector<16x32xf32>
    %c0_3 = arith.constant 0 : index
    %c0_4 = arith.constant 0 : index
    %2 = vector.load %arg2[%c0_3, %c0_4] : memref<32x64xbf16, #tpu.memory_space<vmem>>, vector<32x64xbf16>
    %3 = vector.extract_strided_slice %0 {offsets = [0, 0], sizes = [1, 64], strides = [1, 1]} : vector<3x128xf32> to vector<1x64xf32>
    %4 = arith.truncf %1 : vector<16x32xf32> to vector<16x32xbf16>
    %cst = arith.constant dense<0.000000e+00> : vector<16x64xf32>
    %5 = tpu.matmul %4, %2, %cst {dimension_numbers = #tpu.dot_dimension_numbers<[1], [0], [0], [1], [0, 0, 1, 1], [], []>} : vector<16x32xbf16>, vector<32x64xbf16>, vector<16x64xf32> -> vector<16x64xf32>
    %6 = vector.broadcast %3 : vector<1x64xf32> to vector<16x64xf32>
    %7 = arith.addf %5, %6 : vector<16x64xf32>
    %cst_5 = arith.constant 0.000000e+00 : f32
    %8 = vector.broadcast %cst_5 : f32 to vector<16x64xf32>
    %9 = arith.maximumf %7, %8 : vector<16x64xf32>
    %c0_6 = arith.constant 0 : index
    %c0_7 = arith.constant 0 : index
    %10 = vector.load %arg3[%c0_6, %c0_7] : memref<64x64xbf16, #tpu.memory_space<vmem>>, vector<64x64xbf16>
    %11 = vector.extract_strided_slice %0 {offsets = [1, 0], sizes = [1, 64], strides = [1, 1]} : vector<3x128xf32> to vector<1x64xf32>
    %12 = arith.truncf %9 : vector<16x64xf32> to vector<16x64xbf16>
    %cst_8 = arith.constant dense<0.000000e+00> : vector<16x64xf32>
    %13 = tpu.matmul %12, %10, %cst_8 {dimension_numbers = #tpu.dot_dimension_numbers<[1], [0], [0], [1], [0, 0, 1, 1], [], []>} : vector<16x64xbf16>, vector<64x64xbf16>, vector<16x64xf32> -> vector<16x64xf32>
    %14 = vector.broadcast %11 : vector<1x64xf32> to vector<16x64xf32>
    %15 = arith.addf %13, %14 : vector<16x64xf32>
    %cst_9 = arith.constant 0.000000e+00 : f32
    %16 = vector.broadcast %cst_9 : f32 to vector<16x64xf32>
    %17 = arith.maximumf %15, %16 : vector<16x64xf32>
    %c0_10 = arith.constant 0 : index
    %c0_11 = arith.constant 0 : index
    %18 = vector.load %arg4[%c0_10, %c0_11] : memref<64x16xbf16, #tpu.memory_space<vmem>>, vector<64x16xbf16>
    %19 = vector.extract_strided_slice %0 {offsets = [2, 0], sizes = [1, 16], strides = [1, 1]} : vector<3x128xf32> to vector<1x16xf32>
    %20 = arith.truncf %17 : vector<16x64xf32> to vector<16x64xbf16>
    %cst_12 = arith.constant dense<0.000000e+00> : vector<16x16xf32>
    %21 = tpu.matmul %20, %18, %cst_12 {dimension_numbers = #tpu.dot_dimension_numbers<[1], [0], [0], [1], [0, 0, 1, 1], [], []>} : vector<16x64xbf16>, vector<64x16xbf16>, vector<16x16xf32> -> vector<16x16xf32>
    %22 = vector.broadcast %19 : vector<1x16xf32> to vector<16x16xf32>
    %23 = arith.addf %21, %22 : vector<16x16xf32>
    %c0_13 = arith.constant 0 : index
    %c0_14 = arith.constant 0 : index
    %24 = vector.load %arg6[%c0_13, %c0_14] : memref<16x16xf32, #tpu.memory_space<vmem>>, vector<16x16xf32>
    tpu.vector_store %arg6[%c0_13, %c0_14], %23 {strides = array<i32>} : memref<16x16xf32, #tpu.memory_space<vmem>>, vector<16x16xf32>,
    return
  }
  func.func @transform_0(%arg0: i32) -> (i32, i32) {
    %c0_i32 = arith.constant 0 : i32
    %c0_i32_0 = arith.constant 0 : i32
    return %arg0, %c0_i32 : i32, i32
  }
  func.func @transform_1(%arg0: i32) -> (i32, i32) {
    %c0_i32 = arith.constant 0 : i32
    %c0_i32_0 = arith.constant 0 : i32
    %c0_i32_1 = arith.constant 0 : i32
    return %c0_i32, %c0_i32_0 : i32, i32
  }
  func.func @transform_2(%arg0: i32) -> (i32, i32) {
    %c0_i32 = arith.constant 0 : i32
    %c0_i32_0 = arith.constant 0 : i32
    %c0_i32_1 = arith.constant 0 : i32
    return %c0_i32, %c0_i32_0 : i32, i32
  }
  func.func @transform_3(%arg0: i32) -> (i32, i32) {
    %c0_i32 = arith.constant 0 : i32
    %c0_i32_0 = arith.constant 0 : i32
    %c0_i32_1 = arith.constant 0 : i32
    return %c0_i32, %c0_i32_0 : i32, i32
  }
  func.func @transform_4(%arg0: i32) -> (i32, i32) {
    %c0_i32 = arith.constant 0 : i32
    %c0_i32_0 = arith.constant 0 : i32
    %c0_i32_1 = arith.constant 0 : i32
    return %c0_i32, %c0_i32_0 : i32, i32
  }
  func.func @transform_5(%arg0: i32) -> (i32, i32) {
    %c0_i32 = arith.constant 0 : i32
    %c0_i32_0 = arith.constant 0 : i32
    return %arg0, %c0_i32 : i32, i32
  }
}

</mosaic_0001>

<llo_original>
// kernel: bc_model_forward.1
$region0: #{bc_model_forward.1}
  #allocation0 [shape = 'u32[]', space=smem, size = 0x4, offset = 0x4, fixed_abs, tag = 'smem constant byte address 0x4 - core index']
  #allocation1 [shape = 'u32[144,128]{1,0:T(1,128)}', space=vmem, size = 0x12000, scoped, tag = 'internal scratch']
  %s0 = inlined_call_operand.vmem [shape: f32[16,32], index: 0, kind: input, shape index: {}]
  %s1 = inlined_call_operand.vmem [shape: bf16[32,64], index: 1, kind: input, shape index: {}]
  %s2 = inlined_call_operand.vmem [shape: bf16[64,64], index: 2, kind: input, shape index: {}]
  %s3 = inlined_call_operand.vmem [shape: bf16[64,16], index: 3, kind: input, shape index: {}]
  %s4 = inlined_call_operand.vmem [shape: f32[3,128], index: 4, kind: input, shape index: {}]
  %s5 = inlined_call_operand.vmem [shape: f32[16,16], index: 5, kind: output, shape index: {}]
  %s6 = sld [smem:[#allocation0]]
  $region30: #{bc_model_forward.1} parent=0
    _
  %s8 = ssub.s32 1, %s6
  %s9 = scalar_select 0, %s8, %s6
  // Predicated region
  $region2: #{bc_model_forward.1} parent=0 // pred_check
    _
  $region3: #{bc_model_forward.1} parent=0 // pred_check_branch
    %11 = sbr.rel (0) target = $region5
  $region4: #{bc_model_forward.1} parent=0 // pred_region
    _
  $region5: #{bc_model_forward.1} parent=0 // pred_fallthru
    _
  // Predicated region
  $region6: #{bc_model_forward.1} parent=0 // pred_check
    _
  $region7: #{bc_model_forward.1} parent=0 // pred_check_branch
    %13 = sbr.rel (0) target = $region9
  $region8: #{bc_model_forward.1} parent=0 // pred_region
    _
  $region9: #{bc_model_forward.1} parent=0 // pred_fallthru
    _
  // Predicated region
  $region10: #{bc_model_forward.1} parent=0 // pred_check
    _
  $region11: #{bc_model_forward.1} parent=0 // pred_check_branch
    %15 = sbr.rel (0) target = $region13
  $region12: #{bc_model_forward.1} parent=0 // pred_region
    _
  $region13: #{bc_model_forward.1} parent=0 // pred_fallthru
    _
  // Predicated region
  $region14: #{bc_model_forward.1} parent=0 // pred_check
    _
  $region15: #{bc_model_forward.1} parent=0 // pred_check_branch
    %17 = sbr.rel (0) target = $region17
  $region16: #{bc_model_forward.1} parent=0 // pred_region
    _
  $region17: #{bc_model_forward.1} parent=0 // pred_fallthru
    _
  // Predicated region
  $region18: #{bc_model_forward.1} parent=0 // pred_check
    _
  $region19: #{bc_model_forward.1} parent=0 // pred_check_branch
    %19 = sbr.rel (0) target = $region21
  $region20: #{bc_model_forward.1} parent=0 // pred_region
    _
  $region21: #{bc_model_forward.1} parent=0 // pred_fallthru
    _
  %v21 = vld [vmem:[%s4] sm:$0x7]
  %v22 = vld [vmem:[%s0] sm:$0xff]
  %v23 = vld [vmem:[%s0 + $0x8] sm:$0xff]
  %v24 = vld [vmem:[%s1] sm:$0xf]
  %v25 = vld [vmem:[%s1 + $0x4] sm:$0xf]
  %v26 = vld [vmem:[%s1 + $0x8] sm:$0xf]
  %v27 = vld [vmem:[%s1 + $0xc] sm:$0xf]
  %v28 = vpack.c.bf16 %v23, %v22
  %v29 = vlaneseq
  %v30 = vshrl.u32 %v29, 7
  %v31 = vsub.s32 0, %v30
  %v32 = vrot.slane %v21, %v31
  %v37 = vunpack.c.l.b16 %v24
  %v38 = vunpack.c.l.b16 %v25
  %v39 = vunpack.c.l.b16 %v26
  %v40 = vunpack.c.l.b16 %v27
  %v41 = vpack.c.b16 %v38, %v37
  %v42 = vpack.c.b16 %v40, %v39
  %vm45 = vcmask 261120
  %v47 = vsel %vm45, %v28, 0
  %49 = vmatprep.subr.bf16.mxu0 0
  %50 = vmatpush1.bf16.msra.mxu0 %v41
  %51 = vmatprep.subr.bf16.mxu0 0
  %52 = vmatpush1.bf16.msra.mxu0 %v42
  %53 = vmatprep.subr.bf16.mxu0 0
  %54 = vmatpush1.bf16.msra.mxu0 0
  %55 = vmatprep.subr.bf16.mxu0 0
  %56 = vmatpush1.bf16.msra.mxu0 0
  %57 = vmatprep.subr.bf16.mxu0 0
  %58 = vmatpush1.bf16.msra.mxu0 0
  %59 = vmatprep.subr.bf16.mxu0 0
  %60 = vmatpush1.bf16.msra.mxu0 0
  %61 = vmatprep.subr.bf16.mxu0 0
  %62 = vmatpush1.bf16.msra.mxu0 0
  %63 = vmatprep.subr.bf16.mxu0 0
  %64 = vmatpush1.bf16.msra.mxu0 0
  %65 = vmatprep.subr.bf16.mxu0 0
  %66 = vmatpush1.bf16.msra.mxu0 0
  %67 = vmatprep.subr.bf16.mxu0 0
  %68 = vmatpush1.bf16.msra.mxu0 0
  %69 = vmatprep.subr.bf16.mxu0 0
  %70 = vmatpush1.bf16.msra.mxu0 0
  %71 = vmatprep.subr.bf16.mxu0 0
  %72 = vmatpush1.bf16.msra.mxu0 0
  %73 = vmatprep.subr.bf16.mxu0 0
  %74 = vmatpush1.bf16.msra.mxu0 0
  %75 = vmatprep.subr.bf16.mxu0 0
  %76 = vmatpush1.bf16.msra.mxu0 0
  %77 = vmatprep.subr.bf16.mxu0 0
  %78 = vmatpush1.bf16.msra.mxu0 0
  %79 = vmatprep.subr.bf16.mxu0 0
  %80 = vmatpush1.bf16.msra.mxu0 0
  %81 = vmatprep.mubr.bf16.mxu0 0
  %82 = vmatmul.mubr.bf16.gmra.mrb[0].mxu0 %v47
  %v83 = vpop.f32.mrb[0].mxu0
  %v84 = vadd.f32 %v32, %v83
  %v85 = vpop.f32.mrb[0].mxu0
  %v86 = vpop.f32.mrb[0].mxu0
  %v87 = vadd.f32 %v32, %v86
  %v88 = vpop.f32.mrb[0].mxu0
  %89 = vdwg.mxu0
  %v90 = vmax.f32 %v84, 0.0
  %v91 = vmax.f32 %v87, 0.0
  %v92 = vld [vmem:[%s2] sm:$0xf]
  %v93 = vld [vmem:[%s2 + $0x4] sm:$0xf]
  %v94 = vld [vmem:[%s2 + $0x8] sm:$0xf]
  %v95 = vld [vmem:[%s2 + $0xc] sm:$0xf]
  %v96 = vld [vmem:[%s2 + $0x10] sm:$0xf]
  %v97 = vld [vmem:[%s2 + $0x14] sm:$0xf]
  %v98 = vld [vmem:[%s2 + $0x18] sm:$0xf]
  %v99 = vld [vmem:[%s2 + $0x1c] sm:$0xf]
  %v100 = vpack.c.bf16 %v91, %v90
  %v101 = vlaneseq
  %v102 = vshrl.u32 %v101, 7
  %v103 = vsub.s32 1, %v102
  %v104 = vrot.slane %v21, %v103
  %v113 = vunpack.c.l.b16 %v92
  %v114 = vunpack.c.l.b16 %v93
  %v115 = vunpack.c.l.b16 %v94
  %v116 = vunpack.c.l.b16 %v95
  %v117 = vunpack.c.l.b16 %v96
  %v118 = vunpack.c.l.b16 %v97
  %v119 = vunpack.c.l.b16 %v98
  %v120 = vunpack.c.l.b16 %v99
  %v121 = vpack.c.b16 %v114, %v113
  %v122 = vpack.c.b16 %v116, %v115
  %v123 = vpack.c.b16 %v118, %v117
  %v124 = vpack.c.b16 %v120, %v119
  %vm129 = vcmask 523264
  %v131 = vsel %vm129, %v100, 0
  %133 = vmatprep.subr.bf16.mxu0 0
  %134 = vmatpush1.bf16.msra.mxu0 %v121
  %135 = vmatprep.subr.bf16.mxu0 0
  %136 = vmatpush1.bf16.msra.mxu0 %v122
  %137 = vmatprep.subr.bf16.mxu0 0
  %138 = vmatpush1.bf16.msra.mxu0 %v123
  %139 = vmatprep.subr.bf16.mxu0 0
  %140 = vmatpush1.bf16.msra.mxu0 %v124
  %141 = vmatprep.subr.bf16.mxu0 0
  %142 = vmatpush1.bf16.msra.mxu0 0
  %143 = vmatprep.subr.bf16.mxu0 0
  %144 = vmatpush1.bf16.msra.mxu0 0
  %145 = vmatprep.subr.bf16.mxu0 0
  %146 = vmatpush1.bf16.msra.mxu0 0
  %147 = vmatprep.subr.bf16.mxu0 0
  %148 = vmatpush1.bf16.msra.mxu0 0
  %149 = vmatprep.subr.bf16.mxu0 0
  %150 = vmatpush1.bf16.msra.mxu0 0
  %151 = vmatprep.subr.bf16.mxu0 0
  %152 = vmatpush1.bf16.msra.mxu0 0
  %153 = vmatprep.subr.bf16.mxu0 0
  %154 = vmatpush1.bf16.msra.mxu0 0
  %155 = vmatprep.subr.bf16.mxu0 0
  %156 = vmatpush1.bf16.msra.mxu0 0
  %157 = vmatprep.subr.bf16.mxu0 0
  %158 = vmatpush1.bf16.msra.mxu0 0
  %159 = vmatprep.subr.bf16.mxu0 0
  %160 = vmatpush1.bf16.msra.mxu0 0
  %161 = vmatprep.subr.bf16.mxu0 0
  %162 = vmatpush1.bf16.msra.mxu0 0
  %163 = vmatprep.subr.bf16.mxu0 0
  %164 = vmatpush1.bf16.msra.mxu0 0
  %165 = vmatprep.mubr.bf16.mxu0 0
  %166 = vmatmul.mubr.bf16.gmra.mrb[0].mxu0 %v131
  %v167 = vpop.f32.mrb[0].mxu0
  %v168 = vadd.f32 %v104, %v167
  %v169 = vpop.f32.mrb[0].mxu0
  %v170 = vpop.f32.mrb[0].mxu0
  %v171 = vadd.f32 %v104, %v170
  %v172 = vpop.f32.mrb[0].mxu0
  %173 = vdwg.mxu0
  %v174 = vmax.f32 %v168, 0.0
  %v175 = vmax.f32 %v171, 0.0
  %v176 = vld [vmem:[%s3] sm:$0xf]
  %v177 = vld [vmem:[%s3 + $0x4] sm:$0xf]
  %v178 = vld [vmem:[%s3 + $0x8] sm:$0xf]
  %v179 = vld [vmem:[%s3 + $0xc] sm:$0xf]
  %v180 = vld [vmem:[%s3 + $0x10] sm:$0xf]
  %v181 = vld [vmem:[%s3 + $0x14] sm:$0xf]
  %v182 = vld [vmem:[%s3 + $0x18] sm:$0xf]
  %v183 = vld [vmem:[%s3 + $0x1c] sm:$0xf]
  %v184 = vpack.c.bf16 %v175, %v174
  %v185 = vlaneseq
  %v186 = vshrl.u32 %v185, 7
  %v187 = vsub.s32 2, %v186
  %v188 = vrot.slane %v21, %v187
  %v197 = vunpack.c.l.b16 %v176
  %v198 = vunpack.c.l.b16 %v177
  %v199 = vunpack.c.l.b16 %v178
  %v200 = vunpack.c.l.b16 %v179
  %v201 = vunpack.c.l.b16 %v180
  %v202 = vunpack.c.l.b16 %v181
  %v203 = vunpack.c.l.b16 %v182
  %v204 = vunpack.c.l.b16 %v183
  %v205 = vpack.c.b16 %v198, %v197
  %v206 = vpack.c.b16 %v200, %v199
  %v207 = vpack.c.b16 %v202, %v201
  %v208 = vpack.c.b16 %v204, %v203
  %v214 = vsel %vm129, %v184, 0
  %216 = vmatprep.subr.bf16.mxu0 0
  %217 = vmatpush1.bf16.msra.mxu0 %v205
  %218 = vmatprep.subr.bf16.mxu0 0
  %219 = vmatpush1.bf16.msra.mxu0 %v206
  %220 = vmatprep.subr.bf16.mxu0 0
  %221 = vmatpush1.bf16.msra.mxu0 %v207
  %222 = vmatprep.subr.bf16.mxu0 0
  %223 = vmatpush1.bf16.msra.mxu0 %v208
  %224 = vmatprep.subr.bf16.mxu0 0
  %225 = vmatpush1.bf16.msra.mxu0 0
  %226 = vmatprep.subr.bf16.mxu0 0
  %227 = vmatpush1.bf16.msra.mxu0 0
  %228 = vmatprep.subr.bf16.mxu0 0
  %229 = vmatpush1.bf16.msra.mxu0 0
  %230 = vmatprep.subr.bf16.mxu0 0
  %231 = vmatpush1.bf16.msra.mxu0 0
  %232 = vmatprep.subr.bf16.mxu0 0
  %233 = vmatpush1.bf16.msra.mxu0 0
  %234 = vmatprep.subr.bf16.mxu0 0
  %235 = vmatpush1.bf16.msra.mxu0 0
  %236 = vmatprep.subr.bf16.mxu0 0
  %237 = vmatpush1.bf16.msra.mxu0 0
  %238 = vmatprep.subr.bf16.mxu0 0
  %239 = vmatpush1.bf16.msra.mxu0 0
  %240 = vmatprep.subr.bf16.mxu0 0
  %241 = vmatpush1.bf16.msra.mxu0 0
  %242 = vmatprep.subr.bf16.mxu0 0
  %243 = vmatpush1.bf16.msra.mxu0 0
  %244 = vmatprep.subr.bf16.mxu0 0
  %245 = vmatpush1.bf16.msra.mxu0 0
  %246 = vmatprep.subr.bf16.mxu0 0
  %247 = vmatpush1.bf16.msra.mxu0 0
  %248 = vmatprep.mubr.bf16.mxu0 0
  %249 = vmatmul.mubr.bf16.gmra.mrb[0].mxu0 %v214
  %v250 = vpop.f32.mrb[0].mxu0
  %v251 = vadd.f32 %v188, %v250
  %v252 = vpop.f32.mrb[0].mxu0
  %v253 = vpop.f32.mrb[0].mxu0
  %v254 = vadd.f32 %v188, %v253
  %v255 = vpop.f32.mrb[0].mxu0
  %256 = vdwg.mxu0
  %vm257 = vcmask 130048
  %258 = vst.msk [vmem:[%s5] sm:$0xff] %vm257, %v251
  %259 = vst.msk [vmem:[%s5 + $0x8] sm:$0xff] %vm257, %v254
  // Predicated region
  $region22: #{bc_model_forward.1} parent=0 // pred_check
    _
  $region23: #{bc_model_forward.1} parent=0 // pred_check_branch
    %261 = sbr.rel (0) target = $region25
  $region24: #{bc_model_forward.1} parent=0 // pred_region
    _
  $region25: #{bc_model_forward.1} parent=0 // pred_fallthru
    _
  // Predicated region
  $region26: #{bc_model_forward.1} parent=0 // pred_check
    _
  $region27: #{bc_model_forward.1} parent=0 // pred_check_branch
    %263 = sbr.rel (0) target = $region29
  $region28: #{bc_model_forward.1} parent=0 // pred_region
    _
  $region29: #{bc_model_forward.1} parent=0 // pred_fallthru
    _

</llo_original>
